<compile_context>
chip_gen: v6e
topology: v6e:2x2x1
jax: 0.10.0
libtpu: 0.0.40
codegen_flags: <defaults>
</compile_context>

<pallas_src>
import jax
import jax.numpy as jnp
from jax.experimental import pallas as pl
from jax.experimental.pallas import tpu as pltpu
import numpy as np


def _round_up(n, m):
    return ((n + m - 1) // m) * m


def _geometry(feature_dim, kernel_size):
    """Static lane-packing geometry (all Python ints, trace-time only)."""
    L1 = feature_dim - kernel_size + 1        # conv output length
    L2 = L1 // 2                              # after MaxPool1d(2)
    LSEG = feature_dim                        # lanes per sample segment (holds raw x)
    BCHUNK = max(1, 128 // LSEG)              # samples packed per 128-lane chunk
    NP = _round_up(BCHUNK * LSEG, 128)        # packed lanes per chunk (lane-dense)
    NPC = NP - (kernel_size - 1)              # conv-output width (shifted slices stay in-bounds)
    NPZ = NPC - 1                             # pooled (shift-max) width
    NOUT = 128                                # lane-dense output row per chunk
    return dict(L1=L1, L2=L2, LSEG=LSEG, BCHUNK=BCHUNK, NP=NP, NPC=NPC, NPZ=NPZ, NOUT=NOUT)


def _cnn_fused_kernel(x_ref, wk_ref, bias_ref, w3_ref, selw_ref, c_ref, out_ref):
    """
    One batch-chunk (BCHUNK samples on the lane axis) per grid step.

    x_ref    : (1, Cin, NP)   VMEM  chunk of samples, each in a LSEG-lane segment
    wk_ref   : (K, Cout, Cin) VMEM  conv weight, tap-major
    bias_ref : (Cout, 1)      VMEM  conv bias
    w3_ref   : (1, Cout)      VMEM  fc3 weight row
    selw_ref : (NPZ, 128)     VMEM  fc2-weighted per-sample segment selector
    c_ref    : (1, 1)         SMEM  fused scalar bias  fc2_b*sum(fc3_w)+fc3_b
    out_ref  : (1, 1, 128)    VMEM  sigmoid outputs (first BCHUNK lanes valid)
    """
    K, Cout, Cin = wk_ref.shape
    NP = x_ref.shape[-1]
    NPC = NP - (K - 1)

    xv = x_ref[0]                                            # (Cin, NP), single load

    # ---- Conv1d (valid) as K shifted MXU matmuls: in-VMEM im2col, no HBM patches.
    # Shifts are static lane slices of the loaded value (XLU work, off the VALU).
    y = jnp.dot(wk_ref[0], xv[:, 0:NPC],
                preferred_element_type=jnp.float32)          # (Cout, NPC)
    for k in range(1, K):                                    # K is tiny & static
        y = y + jnp.dot(wk_ref[k], xv[:, k:k + NPC],
                        preferred_element_type=jnp.float32)

    # ---- bias + ReLU (kept in f32: v5e VPU/EUP have no bf16 path).
    # TODO(synk): nn.Dropout is a no-op here (inference semantics), no RNG mask applied.
    y = jnp.maximum(y + bias_ref[...], 0.0)

    # ---- MaxPool1d(2) as a shift-max on values. Only even in-segment positions
    # (< 2*L2 < L1) are ever selected by selw, so invalid / cross-sample lanes
    # produced by the shifted conv never leak into the result.
    z = jnp.maximum(y[:, :NPC - 1], y[:, 1:])                # (Cout, NPZ)

    # ---- fc3 contraction over channels (thin MXU matmul).
    r = jnp.dot(w3_ref[...], z, preferred_element_type=jnp.float32)      # (1, NPZ)

    # ---- fc2 weighting + per-sample segmented lane reduction, fused into one
    # matmul against the cached selector. Result is a lane-dense (1, 128) row.
    g = jnp.dot(r, selw_ref[...], preferred_element_type=jnp.float32)    # (1, 128)

    t = g + c_ref[0, 0]
    # Sigmoid: exp on EUP, approximate reciprocal also on EUP (no VALU divide).
    out_ref[0] = pl.reciprocal(1.0 + jnp.exp(-t), approx=True)


def prepare_cnn_params(conv_w, conv_b, fc2_w, fc2_b, fc3_w, fc3_b, feature_dim):
    """Weight-derived constants. Call ONCE per weight set and reuse across forward
    calls (hoists all scatter/one_hot/transpose preprocessing off the per-call path)."""
    Cout, Cin, K = conv_w.shape
    L2 = fc2_w.shape[-1]
    g = _geometry(feature_dim, K)
    # Pooling positions 2m, 2m+1 (m < L2) must stay inside the valid conv range [0, L1).
    assert 2 * L2 <= g["L1"], (L2, g["L1"])
    assert L2 == g["L1"] // 2, (L2, g["L1"])

    f32 = jnp.float32
    wk = jnp.transpose(conv_w.astype(f32), (2, 0, 1))              # (K, Cout, Cin)
    bias = conv_b.astype(f32).reshape(Cout, 1)                     # (Cout, 1)
    w3row = fc3_w.astype(f32).reshape(1, Cout)                     # (1, Cout)

    # selw[p, j] = fc2_w[m] iff p == j*LSEG + 2*m (m < L2), else 0.
    # Fuses the fc2 weighting with the per-sample segmented reduction; per-chunk
    # constant size, so total work stays linear in the batch size.
    BCHUNK, LSEG, NPZ, NOUT = g["BCHUNK"], g["LSEG"], g["NPZ"], g["NOUT"]
    rows = (jnp.arange(BCHUNK)[:, None] * LSEG + 2 * jnp.arange(L2)[None, :]).reshape(-1)
    cols = jnp.repeat(jnp.arange(BCHUNK), L2)
    vals = jnp.tile(fc2_w.astype(f32).reshape(L2), BCHUNK)
    selw = jnp.zeros((NPZ, NOUT), f32).at[rows, cols].set(vals)

    # Fused scalar bias: fc2_b * sum(fc3_w) + fc3_b, as a (1,1) SMEM scalar.
    c = (fc2_b.reshape(()) * jnp.sum(fc3_w) + fc3_b.reshape(())).astype(f32).reshape(1, 1)
    return wk, bias, w3row, selw, c


def cnn_forward(x, params):
    """x: (B, Cin, feature_dim) float32. Returns (B, 1) sigmoid scores (eval mode)."""
    wk, bias, w3row, selw, c = params
    K, Cout, Cin = wk.shape
    B, Cin_x, L = x.shape
    assert Cin_x == Cin
    g = _geometry(L, K)
    BCHUNK, NP, NPC, NPZ, NOUT = g["BCHUNK"], g["NP"], g["NPC"], g["NPZ"], g["NOUT"]
    assert selw.shape == (NPZ, NOUT), (selw.shape, (NPZ, NOUT))

    G = -(-B // BCHUNK)               # batch chunks == grid steps
    B_pad = G * BCHUNK

    # ---- x-dependent packing only (single pad + transpose-copy, XLA-fused):
    # sample j of chunk g lives in lanes [j*LSEG, j*LSEG + L) of xp[g].
    xf = jnp.pad(x.astype(jnp.float32), ((0, B_pad - B), (0, 0), (0, 0)))
    xp = xf.reshape(G, BCHUNK, Cin, L).transpose(0, 2, 1, 3).reshape(G, Cin, BCHUNK * L)
    if NP > BCHUNK * L:
        xp = jnp.pad(xp, ((0, 0), (0, 0), (0, NP - BCHUNK * L)))

    flops = G * (2 * K * Cout * Cin * NPC        # conv matmuls
                 + 4 * Cout * NPC                # bias + relu + pool max
                 + 2 * Cout * NPZ                # fc3 contraction
                 + 2 * NPZ * NOUT                # fc2-weighted segmented reduce
                 + 4 * NOUT)                     # epilogue
    bytes_accessed = 4 * (xp.size + wk.size + bias.size + w3row.size
                          + selw.size + c.size + G * NOUT)

    out = pl.pallas_call(
        _cnn_fused_kernel,
        out_shape=jax.ShapeDtypeStruct((G, 1, NOUT), jnp.float32),
        grid=(G,),
        in_specs=[
            pl.BlockSpec((1, Cin, NP), lambda i: (i, 0, 0)),       # x chunk
            pl.BlockSpec((K, Cout, Cin), lambda i: (0, 0, 0)),     # conv taps (resident)
            pl.BlockSpec((Cout, 1), lambda i: (0, 0)),             # conv bias
            pl.BlockSpec((1, Cout), lambda i: (0, 0)),             # fc3 row
            pl.BlockSpec((NPZ, NOUT), lambda i: (0, 0)),           # fc2-weighted selector
            pl.BlockSpec(memory_space=pltpu.MemorySpace.SMEM),     # fused scalar bias
        ],
        out_specs=pl.BlockSpec((1, 1, NOUT), lambda i: (i, 0, 0)),
        compiler_params=pltpu.CompilerParams(
            dimension_semantics=("parallel",)),
        cost_estimate=pl.CostEstimate(
            flops=int(flops),
            transcendentals=int(2 * G * NOUT),
            bytes_accessed=int(bytes_accessed)),
    )(xp, wk, bias, w3row, selw, c)

    # first BCHUNK lanes of each chunk row are the real samples, in order.
    return out[:, 0, :BCHUNK].reshape(B_pad, 1)[:B]


def cnn_reference(x, conv_w, conv_b, fc2_w, fc2_b, fc3_w, fc3_b):
    """Pure-JAX reference (independent formulation) for validation."""
    B, Cin, L = x.shape
    Cout, _, K = conv_w.shape
    L1 = L - K + 1
    L2 = L1 // 2
    patches = jnp.stack([x[:, :, k:k + L1] for k in range(K)], axis=-1)  # (B,Cin,L1,K)
    y = jnp.einsum('bclk,ock->bol', patches, conv_w) + conv_b[None, :, None]
    y = jnp.maximum(y, 0.0)
    y = y[:, :, :L2 * 2].reshape(B, Cout, L2, 2).max(axis=-1)            # MaxPool1d(2)
    f = y.reshape(B * Cout, L2) @ fc2_w.T + fc2_b                         # (B*Cout, 1)
    f = f.reshape(B, Cout)
    o = f @ fc3_w.T + fc3_b                                               # (B, 1)
    return jax.nn.sigmoid(o)


if __name__ == "__main__":
    # module hyperparameters (small, consistent with the forward pass)
    B, in_channels, out_channels, kernel_size, feature_dim = 2, 4, 8, 3, 16
    dropout = 0.25   # nn.Dropout: identity at inference
    L1 = feature_dim - kernel_size + 1
    L2 = L1 // 2

    key = jax.random.PRNGKey(0)
    k_x, k_cw, k_cb, k_2w, k_2b, k_3w, k_3b = jax.random.split(key, 7)

    x = jax.random.normal(k_x, (B, in_channels, feature_dim), jnp.float32)

    # PyTorch-style uniform(-1/sqrt(fan_in), 1/sqrt(fan_in)) init, deterministic
    def uinit(k, shape, fan_in):
        bnd = 1.0 / np.sqrt(fan_in)
        return jax.random.uniform(k, shape, jnp.float32, -bnd, bnd)

    conv_w = uinit(k_cw, (out_channels, in_channels, kernel_size), in_channels * kernel_size)
    conv_b = uinit(k_cb, (out_channels,), in_channels * kernel_size)
    fc2_w = uinit(k_2w, (1, L2), L2)
    fc2_b = uinit(k_2b, (1,), L2)
    fc3_w = uinit(k_3w, (1, out_channels), out_channels)
    fc3_b = uinit(k_3b, (1,), out_channels)

    # Weight-derived constants: built once, reused for every forward call.
    params = prepare_cnn_params(conv_w, conv_b, fc2_w, fc2_b, fc3_w, fc3_b, feature_dim)
    forward = jax.jit(cnn_forward)

    out = forward(x, params)
    jax.block_until_ready(out)

    ref = cnn_reference(x, conv_w, conv_b, fc2_w, fc2_b, fc3_w, fc3_b)
    assert out.shape == (B, 1), out.shape
    # Tolerance accommodates the approximate EUP reciprocal used in the fused
    # sigmoid (<~1e-3 rel.); set approx=False in the kernel for bit-tighter parity.
    assert np.allclose(np.asarray(out), np.asarray(ref), atol=5e-3, rtol=5e-3), (out, ref)

    print("KERNEL_OK")
</pallas_src>

<mosaic_0001>
module attributes {stable_mosaic.version = 11 : i64} {
  func.func @_cnn_fused_kernel(%arg0: i32, %arg1: memref<1x4x128xf32, #tpu.memory_space<vmem>>, %arg2: memref<3x8x4xf32, #tpu.memory_space<vmem>>, %arg3: memref<8x1xf32, #tpu.memory_space<vmem>>, %arg4: memref<1x8xf32, #tpu.memory_space<vmem>>, %arg5: memref<125x128xf32, #tpu.memory_space<vmem>>, %arg6: memref<1x1xf32, #tpu.memory_space<smem>>, %arg7: memref<1x1x128xf32, #tpu.memory_space<vmem>>) attributes {dimension_semantics = [#tpu.dimension_semantics<parallel>], iteration_bounds = array<i64: 1>, scalar_prefetch = 0 : i64, scratch_operands = 0 : i64, tpu.core_type = #tpu.core_type<tc>, window_params = [{transform_indices = @transform_0, window_bounds = array<i64: 1, 4, 128>}, {pipeline_mode = #tpu.pipeline_mode<synchronous>, transform_indices = @transform_1, window_bounds = array<i64: 3, 8, 4>}, {pipeline_mode = #tpu.pipeline_mode<synchronous>, transform_indices = @transform_2, window_bounds = array<i64: 8, 1>}, {pipeline_mode = #tpu.pipeline_mode<synchronous>, transform_indices = @transform_3, window_bounds = array<i64: 1, 8>}, {pipeline_mode = #tpu.pipeline_mode<synchronous>, transform_indices = @transform_4, window_bounds = array<i64: 125, 128>}, {transform_indices = @transform_5, window_bounds = array<i64: 1, 1>}, {transform_indices = @transform_6, window_bounds = array<i64: 1, 1, 128>}]} {
    %c0 = arith.constant 0 : index
    %c0_0 = arith.constant 0 : index
    %c0_1 = arith.constant 0 : index
    %0 = vector.load %arg1[%c0, %c0_0, %c0_1] : memref<1x4x128xf32, #tpu.memory_space<vmem>>, vector<1x4x128xf32>
    %1 = vector.shape_cast %0 : vector<1x4x128xf32> to vector<4x128xf32>
    %c0_2 = arith.constant 0 : index
    %c0_3 = arith.constant 0 : index
    %c0_4 = arith.constant 0 : index
    %2 = vector.load %arg2[%c0_2, %c0_3, %c0_4] : memref<3x8x4xf32, #tpu.memory_space<vmem>>, vector<1x8x4xf32>
    %3 = vector.shape_cast %2 : vector<1x8x4xf32> to vector<8x4xf32>
    %4 = vector.extract_strided_slice %1 {offsets = [0, 0], sizes = [4, 126], strides = [1, 1]} : vector<4x128xf32> to vector<4x126xf32>
    %cst = arith.constant dense<0.000000e+00> : vector<8x126xf32>
    %5 = tpu.matmul %3, %4, %cst {dimension_numbers = #tpu.dot_dimension_numbers<[1], [0], [0], [1], [0, 0, 1, 1], [], []>} : vector<8x4xf32>, vector<4x126xf32>, vector<8x126xf32> -> vector<8x126xf32>
    %c1 = arith.constant 1 : index
    %c0_5 = arith.constant 0 : index
    %c0_6 = arith.constant 0 : index
    %6 = vector.load %arg2[%c1, %c0_5, %c0_6] : memref<3x8x4xf32, #tpu.memory_space<vmem>>, vector<1x8x4xf32>
    %7 = vector.shape_cast %6 : vector<1x8x4xf32> to vector<8x4xf32>
    %8 = vector.extract_strided_slice %1 {offsets = [0, 1], sizes = [4, 126], strides = [1, 1]} : vector<4x128xf32> to vector<4x126xf32>
    %cst_7 = arith.constant dense<0.000000e+00> : vector<8x126xf32>
    %9 = tpu.matmul %7, %8, %cst_7 {dimension_numbers = #tpu.dot_dimension_numbers<[1], [0], [0], [1], [0, 0, 1, 1], [], []>} : vector<8x4xf32>, vector<4x126xf32>, vector<8x126xf32> -> vector<8x126xf32>
    %10 = arith.addf %5, %9 : vector<8x126xf32>
    %c2 = arith.constant 2 : index
    %c0_8 = arith.constant 0 : index
    %c0_9 = arith.constant 0 : index
    %11 = vector.load %arg2[%c2, %c0_8, %c0_9] : memref<3x8x4xf32, #tpu.memory_space<vmem>>, vector<1x8x4xf32>
    %12 = vector.shape_cast %11 : vector<1x8x4xf32> to vector<8x4xf32>
    %13 = vector.extract_strided_slice %1 {offsets = [0, 2], sizes = [4, 126], strides = [1, 1]} : vector<4x128xf32> to vector<4x126xf32>
    %cst_10 = arith.constant dense<0.000000e+00> : vector<8x126xf32>
    %14 = tpu.matmul %12, %13, %cst_10 {dimension_numbers = #tpu.dot_dimension_numbers<[1], [0], [0], [1], [0, 0, 1, 1], [], []>} : vector<8x4xf32>, vector<4x126xf32>, vector<8x126xf32> -> vector<8x126xf32>
    %15 = arith.addf %10, %14 : vector<8x126xf32>
    %c0_11 = arith.constant 0 : index
    %c0_12 = arith.constant 0 : index
    %16 = vector.load %arg3[%c0_11, %c0_12] : memref<8x1xf32, #tpu.memory_space<vmem>>, vector<8x1xf32>
    %17 = vector.broadcast %16 : vector<8x1xf32> to vector<8x126xf32>
    %18 = arith.addf %15, %17 : vector<8x126xf32>
    %cst_13 = arith.constant 0.000000e+00 : f32
    %19 = vector.broadcast %cst_13 : f32 to vector<8x126xf32>
    %20 = arith.maximumf %18, %19 : vector<8x126xf32>
    %21 = vector.extract_strided_slice %20 {offsets = [0, 0], sizes = [8, 125], strides = [1, 1]} : vector<8x126xf32> to vector<8x125xf32>
    %22 = vector.extract_strided_slice %20 {offsets = [0, 1], sizes = [8, 125], strides = [1, 1]} : vector<8x126xf32> to vector<8x125xf32>
    %23 = arith.maximumf %21, %22 : vector<8x125xf32>
    %c0_14 = arith.constant 0 : index
    %c0_15 = arith.constant 0 : index
    %24 = vector.load %arg4[%c0_14, %c0_15] : memref<1x8xf32, #tpu.memory_space<vmem>>, vector<1x8xf32>
    %cst_16 = arith.constant dense<0.000000e+00> : vector<1x125xf32>
    %25 = tpu.matmul %24, %23, %cst_16 {dimension_numbers = #tpu.dot_dimension_numbers<[1], [0], [0], [1], [0, 0, 1, 1], [], []>} : vector<1x8xf32>, vector<8x125xf32>, vector<1x125xf32> -> vector<1x125xf32>
    %c0_17 = arith.constant 0 : index
    %c0_18 = arith.constant 0 : index
    %26 = vector.load %arg5[%c0_17, %c0_18] : memref<125x128xf32, #tpu.memory_space<vmem>>, vector<125x128xf32>
    %cst_19 = arith.constant dense<0.000000e+00> : vector<1x128xf32>
    %27 = tpu.matmul %25, %26, %cst_19 {dimension_numbers = #tpu.dot_dimension_numbers<[1], [0], [0], [1], [0, 0, 1, 1], [], []>} : vector<1x125xf32>, vector<125x128xf32>, vector<1x128xf32> -> vector<1x128xf32>
    %c0_20 = arith.constant 0 : index
    %c0_21 = arith.constant 0 : index
    %28 = memref.load %arg6[%c0_20, %c0_21] : memref<1x1xf32, #tpu.memory_space<smem>>
    %29 = vector.broadcast %28 : f32 to vector<1x128xf32>
    %30 = arith.addf %27, %29 : vector<1x128xf32>
    %cst_22 = arith.constant 0.000000e+00 : f32
    %31 = vector.broadcast %cst_22 : f32 to vector<1x128xf32>
    %32 = arith.subf %31, %30 : vector<1x128xf32>
    %33 = math.exp %32 : vector<1x128xf32>
    %cst_23 = arith.constant 1.000000e+00 : f32
    %34 = vector.broadcast %cst_23 : f32 to vector<1x128xf32>
    %35 = arith.addf %34, %33 : vector<1x128xf32>
    %36 = tpu.reciprocal %35 {approx = true} : vector<1x128xf32> -> vector<1x128xf32>
    %c0_24 = arith.constant 0 : index
    %c0_25 = arith.constant 0 : index
    %c0_26 = arith.constant 0 : index
    %37 = vector.load %arg7[%c0_24, %c0_25, %c0_26] : memref<1x1x128xf32, #tpu.memory_space<vmem>>, vector<1x1x128xf32>
    %38 = vector.shape_cast %37 : vector<1x1x128xf32> to vector<1x128xf32>
    %39 = vector.shape_cast %36 : vector<1x128xf32> to vector<1x1x128xf32>
    tpu.vector_store %arg7[%c0_24, %c0_25, %c0_26], %39 {strides = array<i32>} : memref<1x1x128xf32, #tpu.memory_space<vmem>>, vector<1x1x128xf32>,
    return
  }
  func.func @transform_0(%arg0: i32) -> (i32, i32, i32) {
    %c0_i32 = arith.constant 0 : i32
    %c0_i32_0 = arith.constant 0 : i32
    %c0_i32_1 = arith.constant 0 : i32
    return %arg0, %c0_i32, %c0_i32_0 : i32, i32, i32
  }
  func.func @transform_1(%arg0: i32) -> (i32, i32, i32) {
    %c0_i32 = arith.constant 0 : i32
    %c0_i32_0 = arith.constant 0 : i32
    %c0_i32_1 = arith.constant 0 : i32
    %c0_i32_2 = arith.constant 0 : i32
    return %c0_i32, %c0_i32_0, %c0_i32_1 : i32, i32, i32
  }
  func.func @transform_2(%arg0: i32) -> (i32, i32) {
    %c0_i32 = arith.constant 0 : i32
    %c0_i32_0 = arith.constant 0 : i32
    %c0_i32_1 = arith.constant 0 : i32
    return %c0_i32, %c0_i32_0 : i32, i32
  }
  func.func @transform_3(%arg0: i32) -> (i32, i32) {
    %c0_i32 = arith.constant 0 : i32
    %c0_i32_0 = arith.constant 0 : i32
    %c0_i32_1 = arith.constant 0 : i32
    return %c0_i32, %c0_i32_0 : i32, i32
  }
  func.func @transform_4(%arg0: i32) -> (i32, i32) {
    %c0_i32 = arith.constant 0 : i32
    %c0_i32_0 = arith.constant 0 : i32
    %c0_i32_1 = arith.constant 0 : i32
    return %c0_i32, %c0_i32_0 : i32, i32
  }
  func.func @transform_5(%arg0: i32) -> (i32, i32) {
    %c0_i32 = arith.constant 0 : i32
    %c0_i32_0 = arith.constant 0 : i32
    %c0_i32_1 = arith.constant 0 : i32
    return %c0_i32, %c0_i32_0 : i32, i32
  }
  func.func @transform_6(%arg0: i32) -> (i32, i32, i32) {
    %c0_i32 = arith.constant 0 : i32
    %c0_i32_0 = arith.constant 0 : i32
    %c0_i32_1 = arith.constant 0 : i32
    return %arg0, %c0_i32, %c0_i32_0 : i32, i32, i32
  }
}

</mosaic_0001>

<llo_original>
// kernel: cnn_forward.1
$region0: #{cnn_forward.1}
  #allocation0 [shape = 'u32[]', space=smem, size = 0x4, offset = 0x4, fixed_abs, tag = 'smem constant byte address 0x4 - core index']
  #allocation1 [shape = 'u32[144,128]{1,0:T(1,128)}', space=vmem, size = 0x12000, scoped, tag = 'internal scratch']
  #allocation2 [shape = 'f32[1,1]{1,0:T(1,128)S(6)}', space=smem, size = 0x200, scoped, tag = 'scoped memory for cnn_forward.1']
  %s0 = inlined_call_operand.vmem [shape: f32[1,4,128], index: 0, kind: input, shape index: {}]
  %s1 = inlined_call_operand.vmem [shape: f32[3,8,4], index: 1, kind: input, shape index: {}]
  %s2 = inlined_call_operand.vmem [shape: f32[8,1], index: 2, kind: input, shape index: {}]
  %s3 = inlined_call_operand.vmem [shape: f32[1,8], index: 3, kind: input, shape index: {}]
  %s4 = inlined_call_operand.vmem [shape: f32[125,128], index: 4, kind: input, shape index: {}]
  %s5 = inlined_call_operand.<no memory space> [shape: f32[1,1], index: 5, kind: input, shape index: {}]
  %s6 = inlined_call_operand.vmem [shape: f32[1,1,128], index: 6, kind: output, shape index: {}]
  %s7 = sld [smem:[#allocation0]]
  $region34: #{cnn_forward.1} parent=0
    _
  %s9 = ssub.s32 1, %s7
  %s10 = scalar_select 0, %s9, %s7
  %11 = sst [smem:[#allocation2]] %s5
  // Predicated region
  $region2: #{cnn_forward.1} parent=0 // pred_check
    _
  $region3: #{cnn_forward.1} parent=0 // pred_check_branch
    %13 = sbr.rel (0) target = $region5
  $region4: #{cnn_forward.1} parent=0 // pred_region
    _
  $region5: #{cnn_forward.1} parent=0 // pred_fallthru
    _
  // Predicated region
  $region6: #{cnn_forward.1} parent=0 // pred_check
    _
  $region7: #{cnn_forward.1} parent=0 // pred_check_branch
    %15 = sbr.rel (0) target = $region9
  $region8: #{cnn_forward.1} parent=0 // pred_region
    _
  $region9: #{cnn_forward.1} parent=0 // pred_fallthru
    _
  // Predicated region
  $region10: #{cnn_forward.1} parent=0 // pred_check
    _
  $region11: #{cnn_forward.1} parent=0 // pred_check_branch
    %17 = sbr.rel (0) target = $region13
  $region12: #{cnn_forward.1} parent=0 // pred_region
    _
  $region13: #{cnn_forward.1} parent=0 // pred_fallthru
    _
  // Predicated region
  $region14: #{cnn_forward.1} parent=0 // pred_check
    _
  $region15: #{cnn_forward.1} parent=0 // pred_check_branch
    %19 = sbr.rel (0) target = $region17
  $region16: #{cnn_forward.1} parent=0 // pred_region
    _
  $region17: #{cnn_forward.1} parent=0 // pred_fallthru
    _
  // Predicated region
  $region18: #{cnn_forward.1} parent=0 // pred_check
    _
  $region19: #{cnn_forward.1} parent=0 // pred_check_branch
    %21 = sbr.rel (0) target = $region21
  $region20: #{cnn_forward.1} parent=0 // pred_region
    _
  $region21: #{cnn_forward.1} parent=0 // pred_fallthru
    _
  // Predicated region
  $region22: #{cnn_forward.1} parent=0 // pred_check
    _
  $region23: #{cnn_forward.1} parent=0 // pred_check_branch
    %23 = sbr.rel (0) target = $region25
  $region24: #{cnn_forward.1} parent=0 // pred_region
    _
  $region25: #{cnn_forward.1} parent=0 // pred_fallthru
    _
  %v24 = vld [vmem:[%s0] sm:$0xf]
  %v25 = vld [vmem:[%s1] sm:$0xff]
  %s26 = scalar_lea.vmem %s1, 8
  %v27 = vld [vmem:[%s26] sm:$0xff]
  %29 = vrot.lane.b32.xlu0 %v24, 127
  %v30 = vpop.permute.xlu0 %29
  %vm31 = vcmask 31744
  %v33 = vsel %vm31, %v27, 0
  %vm35 = vcmask 1043456
  %v36 = vsel %vm35, %v30, 0
  %38 = vmatprep.subr.mxu0 0.0
  %39 = vmatpush1.msra.mxu0 0.0
  %40 = vmatprep.subr.mxu0 0.0
  %41 = vmatpush1.msra.mxu0 0.0
  %42 = vmatprep.subr.mxu0 0.0
  %43 = vmatpush1.msra.mxu0 0.0
  %44 = vmatprep.subr.mxu0 0.0
  %45 = vmatpush1.msra.mxu0 0.0
  %46 = vmatprep.subr.mxu0 0.0
  %47 = vmatpush1.msra.mxu0 0.0
  %48 = vmatprep.subr.mxu0 0.0
  %49 = vmatpush1.msra.mxu0 0.0
  %50 = vmatprep.subr.mxu0 0.0
  %51 = vmatpush1.msra.mxu0 0.0
  %52 = vmatprep.subr.mxu0 0.0
  %53 = vmatpush1.msra.mxu0 0.0
  %54 = vmatprep.subr.mxu0 0.0
  %55 = vmatpush1.msra.mxu0 0.0
  %56 = vmatprep.subr.mxu0 0.0
  %57 = vmatpush1.msra.mxu0 0.0
  %58 = vmatprep.subr.mxu0 0.0
  %59 = vmatpush1.msra.mxu0 0.0
  %60 = vmatprep.subr.mxu0 0.0
  %61 = vmatpush1.msra.mxu0 0.0
  %62 = vmatprep.subr.mxu0 0.0
  %63 = vmatpush1.msra.mxu0 0.0
  %64 = vmatprep.subr.mxu0 0.0
  %65 = vmatpush1.msra.mxu0 0.0
  %66 = vmatprep.subr.mxu0 0.0
  %67 = vmatpush1.msra.mxu0 0.0
  %68 = vmatprep.subr.mxu0 0.0
  %69 = vmatpush1.msra.mxu0 %v36
  %70 = vmatprep.subr.mxu0 0.0
  %71 = vmatpush2.msra.mxu0 0.0
  %72 = vmatprep.subr.mxu0 0.0
  %73 = vmatpush2.msra.mxu0 0.0
  %74 = vmatprep.subr.mxu0 0.0
  %75 = vmatpush2.msra.mxu0 0.0
  %76 = vmatprep.subr.mxu0 0.0
  %77 = vmatpush2.msra.mxu0 0.0
  %78 = vmatprep.subr.mxu0 0.0
  %79 = vmatpush2.msra.mxu0 0.0
  %80 = vmatprep.subr.mxu0 0.0
  %81 = vmatpush2.msra.mxu0 0.0
  %82 = vmatprep.subr.mxu0 0.0
  %83 = vmatpush2.msra.mxu0 0.0
  %84 = vmatprep.subr.mxu0 0.0
  %85 = vmatpush2.msra.mxu0 0.0
  %86 = vmatprep.subr.mxu0 0.0
  %87 = vmatpush2.msra.mxu0 0.0
  %88 = vmatprep.subr.mxu0 0.0
  %89 = vmatpush2.msra.mxu0 0.0
  %90 = vmatprep.subr.mxu0 0.0
  %91 = vmatpush2.msra.mxu0 0.0
  %92 = vmatprep.subr.mxu0 0.0
  %93 = vmatpush2.msra.mxu0 0.0
  %94 = vmatprep.subr.mxu0 0.0
  %95 = vmatpush2.msra.mxu0 0.0
  %96 = vmatprep.subr.mxu0 0.0
  %97 = vmatpush2.msra.mxu0 0.0
  %98 = vmatprep.subr.mxu0 0.0
  %99 = vmatpush2.msra.mxu0 0.0
  %100 = vmatprep.subr.mxu0 0.0
  %101 = vmatpush2.msra.mxu0 0.0
  %102 = vmatprep.mubr.f32.mxu0 0.0
  %103 = vmatmul.mubr.f32.gmra.mxu0 %v33
  %v104 = vpop.f32.mrf.mxu0
  %v105 = vadd.f32 0.0, %v104
  %v106 = vpop.f32.mrf.mxu0
  %107 = vdwg.mxu0
  %v109 = vsel %vm31, %v25, 0
  %v111 = vsel %vm35, %v24, 0
  %113 = vmatprep.subr.mxu0 0.0
  %114 = vmatpush1.msra.mxu0 0.0
  %115 = vmatprep.subr.mxu0 0.0
  %116 = vmatpush1.msra.mxu0 0.0
  %117 = vmatprep.subr.mxu0 0.0
  %118 = vmatpush1.msra.mxu0 0.0
  %119 = vmatprep.subr.mxu0 0.0
  %120 = vmatpush1.msra.mxu0 0.0
  %121 = vmatprep.subr.mxu0 0.0
  %122 = vmatpush1.msra.mxu0 0.0
  %123 = vmatprep.subr.mxu0 0.0
  %124 = vmatpush1.msra.mxu0 0.0
  %125 = vmatprep.subr.mxu0 0.0
  %126 = vmatpush1.msra.mxu0 0.0
  %127 = vmatprep.subr.mxu0 0.0
  %128 = vmatpush1.msra.mxu0 0.0
  %129 = vmatprep.subr.mxu0 0.0
  %130 = vmatpush1.msra.mxu0 0.0
  %131 = vmatprep.subr.mxu0 0.0
  %132 = vmatpush1.msra.mxu0 0.0
  %133 = vmatprep.subr.mxu0 0.0
  %134 = vmatpush1.msra.mxu0 0.0
  %135 = vmatprep.subr.mxu0 0.0
  %136 = vmatpush1.msra.mxu0 0.0
  %137 = vmatprep.subr.mxu0 0.0
  %138 = vmatpush1.msra.mxu0 0.0
  %139 = vmatprep.subr.mxu0 0.0
  %140 = vmatpush1.msra.mxu0 0.0
  %141 = vmatprep.subr.mxu0 0.0
  %142 = vmatpush1.msra.mxu0 0.0
  %143 = vmatprep.subr.mxu0 0.0
  %144 = vmatpush1.msra.mxu0 %v111
  %145 = vmatprep.subr.mxu0 0.0
  %146 = vmatpush2.msra.mxu0 0.0
  %147 = vmatprep.subr.mxu0 0.0
  %148 = vmatpush2.msra.mxu0 0.0
  %149 = vmatprep.subr.mxu0 0.0
  %150 = vmatpush2.msra.mxu0 0.0
  %151 = vmatprep.subr.mxu0 0.0
  %152 = vmatpush2.msra.mxu0 0.0
  %153 = vmatprep.subr.mxu0 0.0
  %154 = vmatpush2.msra.mxu0 0.0
  %155 = vmatprep.subr.mxu0 0.0
  %156 = vmatpush2.msra.mxu0 0.0
  %157 = vmatprep.subr.mxu0 0.0
  %158 = vmatpush2.msra.mxu0 0.0
  %159 = vmatprep.subr.mxu0 0.0
  %160 = vmatpush2.msra.mxu0 0.0
  %161 = vmatprep.subr.mxu0 0.0
  %162 = vmatpush2.msra.mxu0 0.0
  %163 = vmatprep.subr.mxu0 0.0
  %164 = vmatpush2.msra.mxu0 0.0
  %165 = vmatprep.subr.mxu0 0.0
  %166 = vmatpush2.msra.mxu0 0.0
  %167 = vmatprep.subr.mxu0 0.0
  %168 = vmatpush2.msra.mxu0 0.0
  %169 = vmatprep.subr.mxu0 0.0
  %170 = vmatpush2.msra.mxu0 0.0
  %171 = vmatprep.subr.mxu0 0.0
  %172 = vmatpush2.msra.mxu0 0.0
  %173 = vmatprep.subr.mxu0 0.0
  %174 = vmatpush2.msra.mxu0 0.0
  %175 = vmatprep.subr.mxu0 0.0
  %176 = vmatpush2.msra.mxu0 0.0
  %177 = vmatprep.mubr.f32.mxu0 0.0
  %178 = vmatmul.mubr.f32.gmra.mxu0 %v109
  %v179 = vpop.f32.mrf.mxu0
  %v180 = vadd.f32 %v105, %v179
  %v181 = vpop.f32.mrf.mxu0
  %182 = vdwg.mxu0
  %s183 = scalar_lea.vmem %s1, 16
  %v184 = vld [vmem:[%s183] sm:$0xff]
  %185 = vrot.lane.b32.xlu0 %v24, 126
  %v186 = vpop.permute.xlu0 %185
  %v188 = vsel %vm31, %v184, 0
  %v190 = vsel %vm35, %v186, 0
  %192 = vmatprep.subr.mxu0 0.0
  %193 = vmatpush1.msra.mxu0 0.0
  %194 = vmatprep.subr.mxu0 0.0
  %195 = vmatpush1.msra.mxu0 0.0
  %196 = vmatprep.subr.mxu0 0.0
  %197 = vmatpush1.msra.mxu0 0.0
  %198 = vmatprep.subr.mxu0 0.0
  %199 = vmatpush1.msra.mxu0 0.0
  %200 = vmatprep.subr.mxu0 0.0
  %201 = vmatpush1.msra.mxu0 0.0
  %202 = vmatprep.subr.mxu0 0.0
  %203 = vmatpush1.msra.mxu0 0.0
  %204 = vmatprep.subr.mxu0 0.0
  %205 = vmatpush1.msra.mxu0 0.0
  %206 = vmatprep.subr.mxu0 0.0
  %207 = vmatpush1.msra.mxu0 0.0
  %208 = vmatprep.subr.mxu0 0.0
  %209 = vmatpush1.msra.mxu0 0.0
  %210 = vmatprep.subr.mxu0 0.0
  %211 = vmatpush1.msra.mxu0 0.0
  %212 = vmatprep.subr.mxu0 0.0
  %213 = vmatpush1.msra.mxu0 0.0
  %214 = vmatprep.subr.mxu0 0.0
  %215 = vmatpush1.msra.mxu0 0.0
  %216 = vmatprep.subr.mxu0 0.0
  %217 = vmatpush1.msra.mxu0 0.0
  %218 = vmatprep.subr.mxu0 0.0
  %219 = vmatpush1.msra.mxu0 0.0
  %220 = vmatprep.subr.mxu0 0.0
  %221 = vmatpush1.msra.mxu0 0.0
  %222 = vmatprep.subr.mxu0 0.0
  %223 = vmatpush1.msra.mxu0 %v190
  %224 = vmatprep.subr.mxu0 0.0
  %225 = vmatpush2.msra.mxu0 0.0
  %226 = vmatprep.subr.mxu0 0.0
  %227 = vmatpush2.msra.mxu0 0.0
  %228 = vmatprep.subr.mxu0 0.0
  %229 = vmatpush2.msra.mxu0 0.0
  %230 = vmatprep.subr.mxu0 0.0
  %231 = vmatpush2.msra.mxu0 0.0
  %232 = vmatprep.subr.mxu0 0.0
  %233 = vmatpush2.msra.mxu0 0.0
  %234 = vmatprep.subr.mxu0 0.0
  %235 = vmatpush2.msra.mxu0 0.0
  %236 = vmatprep.subr.mxu0 0.0
  %237 = vmatpush2.msra.mxu0 0.0
  %238 = vmatprep.subr.mxu0 0.0
  %239 = vmatpush2.msra.mxu0 0.0
  %240 = vmatprep.subr.mxu0 0.0
  %241 = vmatpush2.msra.mxu0 0.0
  %242 = vmatprep.subr.mxu0 0.0
  %243 = vmatpush2.msra.mxu0 0.0
  %244 = vmatprep.subr.mxu0 0.0
  %245 = vmatpush2.msra.mxu0 0.0
  %246 = vmatprep.subr.mxu0 0.0
  %247 = vmatpush2.msra.mxu0 0.0
  %248 = vmatprep.subr.mxu0 0.0
  %249 = vmatpush2.msra.mxu0 0.0
  %250 = vmatprep.subr.mxu0 0.0
  %251 = vmatpush2.msra.mxu0 0.0
  %252 = vmatprep.subr.mxu0 0.0
  %253 = vmatpush2.msra.mxu0 0.0
  %254 = vmatprep.subr.mxu0 0.0
  %255 = vmatpush2.msra.mxu0 0.0
  %256 = vmatprep.mubr.f32.mxu0 0.0
  %257 = vmatmul.mubr.f32.gmra.mxu0 %v188
  %v258 = vpop.f32.mrf.mxu0
  %v259 = vadd.f32 0.0, %v258
  %v260 = vpop.f32.mrf.mxu0
  %261 = vdwg.mxu0
  %v262 = vadd.f32 %v180, %v259
  %v263 = vld [vmem:[%s2] sm:$0xff]
  %265 = vset.pattern.permute.xlu0 0
  %266 = vperm.xlu0 %265, %v263
  %v267 = vpop.permute.xlu0 %266
  %v269 = vadd.f32 %v262, %v267
  %v270 = vmax.f32 %v269, 0.0
  %272 = vrot.lane.b32.xlu0 %v270, 127
  %v273 = vpop.permute.xlu0 %272
  %v275 = vmax.f32 %v270, %v273
  %v276 = vld [vmem:[%s3] sm:$0x1]
  %vm277 = vcmask 64512
  %v279 = vsel %vm277, %v276, 0
  %281 = vmatprep.subr.mxu0 0.0
  %282 = vmatpush1.msra.mxu0 0.0
  %283 = vmatprep.subr.mxu0 0.0
  %284 = vmatpush1.msra.mxu0 0.0
  %285 = vmatprep.subr.mxu0 0.0
  %286 = vmatpush1.msra.mxu0 0.0
  %287 = vmatprep.subr.mxu0 0.0
  %288 = vmatpush1.msra.mxu0 0.0
  %289 = vmatprep.subr.mxu0 0.0
  %290 = vmatpush1.msra.mxu0 0.0
  %291 = vmatprep.subr.mxu0 0.0
  %292 = vmatpush1.msra.mxu0 0.0
  %293 = vmatprep.subr.mxu0 0.0
  %294 = vmatpush1.msra.mxu0 0.0
  %295 = vmatprep.subr.mxu0 0.0
  %296 = vmatpush1.msra.mxu0 0.0
  %297 = vmatprep.subr.mxu0 0.0
  %298 = vmatpush1.msra.mxu0 0.0
  %299 = vmatprep.subr.mxu0 0.0
  %300 = vmatpush1.msra.mxu0 0.0
  %301 = vmatprep.subr.mxu0 0.0
  %302 = vmatpush1.msra.mxu0 0.0
  %303 = vmatprep.subr.mxu0 0.0
  %304 = vmatpush1.msra.mxu0 0.0
  %305 = vmatprep.subr.mxu0 0.0
  %306 = vmatpush1.msra.mxu0 0.0
  %307 = vmatprep.subr.mxu0 0.0
  %308 = vmatpush1.msra.mxu0 0.0
  %309 = vmatprep.subr.mxu0 0.0
  %310 = vmatpush1.msra.mxu0 0.0
  %311 = vmatprep.subr.mxu0 0.0
  %312 = vmatpush1.msra.mxu0 %v275
  %313 = vmatprep.subr.mxu0 0.0
  %314 = vmatpush2.msra.mxu0 0.0
  %315 = vmatprep.subr.mxu0 0.0
  %316 = vmatpush2.msra.mxu0 0.0
  %317 = vmatprep.subr.mxu0 0.0
  %318 = vmatpush2.msra.mxu0 0.0
  %319 = vmatprep.subr.mxu0 0.0
  %320 = vmatpush2.msra.mxu0 0.0
  %321 = vmatprep.subr.mxu0 0.0
  %322 = vmatpush2.msra.mxu0 0.0
  %323 = vmatprep.subr.mxu0 0.0
  %324 = vmatpush2.msra.mxu0 0.0
  %325 = vmatprep.subr.mxu0 0.0
  %326 = vmatpush2.msra.mxu0 0.0
  %327 = vmatprep.subr.mxu0 0.0
  %328 = vmatpush2.msra.mxu0 0.0
  %329 = vmatprep.subr.mxu0 0.0
  %330 = vmatpush2.msra.mxu0 0.0
  %331 = vmatprep.subr.mxu0 0.0
  %332 = vmatpush2.msra.mxu0 0.0
  %333 = vmatprep.subr.mxu0 0.0
  %334 = vmatpush2.msra.mxu0 0.0
  %335 = vmatprep.subr.mxu0 0.0
  %336 = vmatpush2.msra.mxu0 0.0
  %337 = vmatprep.subr.mxu0 0.0
  %338 = vmatpush2.msra.mxu0 0.0
  %339 = vmatprep.subr.mxu0 0.0
  %340 = vmatpush2.msra.mxu0 0.0
  %341 = vmatprep.subr.mxu0 0.0
  %342 = vmatpush2.msra.mxu0 0.0
  %343 = vmatprep.subr.mxu0 0.0
  %344 = vmatpush2.msra.mxu0 0.0
  %345 = vmatprep.mubr.f32.mxu0 0.0
  %346 = vmatmul.mubr.f32.gmra.mxu0 %v279
  %v347 = vpop.f32.mrf.mxu0
  %v348 = vadd.f32 0.0, %v347
  %v349 = vpop.f32.mrf.mxu0
  %350 = vdwg.mxu0
  %v351 = vld [vmem:[%s4] sm:$0xff]
  %v352 = vld [vmem:[%s4 + $0x8] sm:$0xff]
  %v353 = vld [vmem:[%s4 + $0x10] sm:$0xff]
  %v354 = vld [vmem:[%s4 + $0x18] sm:$0xff]
  %v355 = vld [vmem:[%s4 + $0x20] sm:$0xff]
  %v356 = vld [vmem:[%s4 + $0x28] sm:$0xff]
  %v357 = vld [vmem:[%s4 + $0x30] sm:$0xff]
  %v358 = vld [vmem:[%s4 + $0x38] sm:$0xff]
  %v359 = vld [vmem:[%s4 + $0x40] sm:$0xff]
  %v360 = vld [vmem:[%s4 + $0x48] sm:$0xff]
  %v361 = vld [vmem:[%s4 + $0x50] sm:$0xff]
  %v362 = vld [vmem:[%s4 + $0x58] sm:$0xff]
  %v363 = vld [vmem:[%s4 + $0x60] sm:$0xff]
  %v364 = vld [vmem:[%s4 + $0x68] sm:$0xff]
  %v365 = vld [vmem:[%s4 + $0x70] sm:$0xff]
  %v366 = vld [vmem:[%s4 + $0x78] sm:$0x1f]
  %s367 = sld [smem:[#allocation2]]
  %v368 = vstv %s367
  %vm369 = vcmask 1022976
  %v371 = vsel %vm369, %v348, 0
  %vm373 = vcmask 1044480
  %v375 = vsel %vm373, %v366, 0
  %377 = vmatprep.subr.mxu0 0.0
  %378 = vmatpush1.msra.mxu0 %v375
  %379 = vmatprep.subr.mxu0 0.0
  %380 = vmatpush1.msra.mxu0 %v365
  %381 = vmatprep.subr.mxu0 0.0
  %382 = vmatpush1.msra.mxu0 %v364
  %383 = vmatprep.subr.mxu0 0.0
  %384 = vmatpush1.msra.mxu0 %v363
  %385 = vmatprep.subr.mxu0 0.0
  %386 = vmatpush1.msra.mxu0 %v362
  %387 = vmatprep.subr.mxu0 0.0
  %388 = vmatpush1.msra.mxu0 %v361
  %389 = vmatprep.subr.mxu0 0.0
  %390 = vmatpush1.msra.mxu0 %v360
  %391 = vmatprep.subr.mxu0 0.0
  %392 = vmatpush1.msra.mxu0 %v359
  %393 = vmatprep.subr.mxu0 0.0
  %394 = vmatpush1.msra.mxu0 %v358
  %395 = vmatprep.subr.mxu0 0.0
  %396 = vmatpush1.msra.mxu0 %v357
  %397 = vmatprep.subr.mxu0 0.0
  %398 = vmatpush1.msra.mxu0 %v356
  %399 = vmatprep.subr.mxu0 0.0
  %400 = vmatpush1.msra.mxu0 %v355
  %401 = vmatprep.subr.mxu0 0.0
  %402 = vmatpush1.msra.mxu0 %v354
  %403 = vmatprep.subr.mxu0 0.0
  %404 = vmatpush1.msra.mxu0 %v353
  %405 = vmatprep.subr.mxu0 0.0
  %406 = vmatpush1.msra.mxu0 %v352
  %407 = vmatprep.subr.mxu0 0.0
  %408 = vmatpush1.msra.mxu0 %v351
  %409 = vmatprep.subr.mxu0 0.0
  %410 = vmatpush2.msra.mxu0 0.0
  %411 = vmatprep.subr.mxu0 0.0
  %412 = vmatpush2.msra.mxu0 0.0
  %413 = vmatprep.subr.mxu0 0.0
  %414 = vmatpush2.msra.mxu0 0.0
  %415 = vmatprep.subr.mxu0 0.0
  %416 = vmatpush2.msra.mxu0 0.0
  %417 = vmatprep.subr.mxu0 0.0
  %418 = vmatpush2.msra.mxu0 0.0
  %419 = vmatprep.subr.mxu0 0.0
  %420 = vmatpush2.msra.mxu0 0.0
  %421 = vmatprep.subr.mxu0 0.0
  %422 = vmatpush2.msra.mxu0 0.0
  %423 = vmatprep.subr.mxu0 0.0
  %424 = vmatpush2.msra.mxu0 0.0
  %425 = vmatprep.subr.mxu0 0.0
  %426 = vmatpush2.msra.mxu0 0.0
  %427 = vmatprep.subr.mxu0 0.0
  %428 = vmatpush2.msra.mxu0 0.0
  %429 = vmatprep.subr.mxu0 0.0
  %430 = vmatpush2.msra.mxu0 0.0
  %431 = vmatprep.subr.mxu0 0.0
  %432 = vmatpush2.msra.mxu0 0.0
  %433 = vmatprep.subr.mxu0 0.0
  %434 = vmatpush2.msra.mxu0 0.0
  %435 = vmatprep.subr.mxu0 0.0
  %436 = vmatpush2.msra.mxu0 0.0
  %437 = vmatprep.subr.mxu0 0.0
  %438 = vmatpush2.msra.mxu0 0.0
  %439 = vmatprep.subr.mxu0 0.0
  %440 = vmatpush2.msra.mxu0 0.0
  %441 = vmatprep.mubr.f32.mxu0 0.0
  %442 = vmatmul.mubr.f32.gmra.mxu0 %v371
  %v443 = vpop.f32.mrf.mxu0
  %v444 = vadd.f32 %v368, %v443
  %v445 = vpop.f32.mrf.mxu0
  %446 = vdwg.mxu0
  %v447 = vsub.f32 0.0, %v444
  %v448 = vmul.f32 %v447, 1.442695
  %v449 = vpow.pop %v448
  %v450 = vadd.f32 %v449, 1.0
  %v451 = vrcp.pop %v450
  %452 = vst [vmem:[%s6] sm:$0x1] %v451
  // Predicated region
  $region26: #{cnn_forward.1} parent=0 // pred_check
    _
  $region27: #{cnn_forward.1} parent=0 // pred_check_branch
    %454 = sbr.rel (0) target = $region29
  $region28: #{cnn_forward.1} parent=0 // pred_region
    _
  $region29: #{cnn_forward.1} parent=0 // pred_fallthru
    _
  // Predicated region
  $region30: #{cnn_forward.1} parent=0 // pred_check
    _
  $region31: #{cnn_forward.1} parent=0 // pred_check_branch
    %456 = sbr.rel (0) target = $region33
  $region32: #{cnn_forward.1} parent=0 // pred_region
    _
  $region33: #{cnn_forward.1} parent=0 // pred_fallthru
    _

</llo_original>
